<compile_context>
chip_gen: v6e
topology: v6e:2x2x1
jax: 0.10.0
libtpu: 0.0.40
codegen_flags: <defaults>
</compile_context>

<pallas_src>
import jax
import jax.numpy as jnp
from jax.experimental import pallas as pl
from jax.experimental.pallas import tpu as pltpu

_LANE = 128


def _round_up(x, m):
    return ((x + m - 1) // m) * m


def mlp_kernel(x_ref,
               w1_ref, b1_ref,
               w2_ref, b2_ref,
               w3_ref, b3_ref,
               w4_ref, b4_ref,
               w5_ref, b5_ref,
               o_ref):
    """One batch tile: x (TM, size) f32 -> o (TM, 1) f32."""
    compute_dtype = w1_ref.dtype                 # bf16 weights / activations
    # Cast f32 -> bf16 inside the kernel (VPU filler under the MXU); the
    # wrapper no longer makes a separate HBM pass to cast x.
    h = x_ref[...].astype(compute_dtype)         # (TM, size)

    # fc1..fc4: MXU matmul with f32 accumulation, bias + ReLU on the VPU in
    # f32, re-quantize to bf16 for the next MXU pass.
    for w_ref, b_ref in ((w1_ref, b1_ref), (w2_ref, b2_ref),
                         (w3_ref, b3_ref), (w4_ref, b4_ref)):
        h = jnp.dot(h, w_ref[...], preferred_element_type=jnp.float32) + b_ref[...]
        h = jnp.maximum(h, 0.0).astype(compute_dtype)

    # fc5: (TM,128) @ (128,1) -> (TM,1); no operand transpose, tiny store.
    z = jnp.dot(h, w5_ref[...], preferred_element_type=jnp.float32) + b5_ref[...]
    o_ref[...] = jax.nn.sigmoid(z).astype(o_ref.dtype)


def prepare_params(params, compute_dtype=jnp.bfloat16):
    """Pad hidden dims to multiples of 128, cast weights to `compute_dtype`.

    params: list of (W, b) pairs, W shape (in, out), b shape (1, out), float32.
    Returns a flat list [w1, b1, ..., w5, b5] where each w_i is zero-padded to
    (in_pad, out_pad) in compute_dtype and biases are zero-padded (1, out_pad)
    f32.  The final layer keeps out=1 (so the kernel output block is (TM, 1)).
    Padded lanes carry zero weights and zero biases, and ReLU(0)=0, so the
    padded computation is exact.
    """
    flat = []
    n = len(params)
    prev_out_pad = params[0][0].shape[0]          # input feature dim, unpadded
    for i, (w, b) in enumerate(params):
        fan_in, fan_out = w.shape
        in_pad = prev_out_pad
        last = (i == n - 1)
        out_pad = fan_out if last else _round_up(fan_out, _LANE)
        wp = jnp.zeros((in_pad, out_pad), jnp.float32).at[:fan_in, :fan_out].set(w)
        bp = jnp.zeros((1, out_pad), jnp.float32).at[:, :fan_out].set(b)
        flat.append(wp.astype(compute_dtype))
        flat.append(bp)                            # biases stay f32
        prev_out_pad = out_pad
    return flat


def _vmem_bytes_estimate(tm, size, param_bytes):
    """Conservative per-core VMEM estimate for a batch tile of TM rows."""
    x_bufs = 2 * tm * size * 4          # double-buffered f32 input tile
    out_bufs = 2 * tm * 1 * 4           # double-buffered f32 output tile
    acts = 6 * tm * 256 * 4             # generous bound on live activation temps
    return param_bytes + x_bufs + out_bufs + acts


def net_forward(x, params, *, tm=2048, compute_dtype=jnp.bfloat16):
    """x: (B, size) float32. params: list of (W (in,out), b (1,out)) f32 pairs."""
    B, size = x.shape
    flat_params = prepare_params(params, compute_dtype)
    param_bytes = sum(int(p.size) * p.dtype.itemsize for p in flat_params)

    # ---- Batch-tile (TM) selection -------------------------------------
    b128 = _round_up(max(B, 1), _LANE)
    tm = max(_LANE, min(_round_up(tm, _LANE), b128))
    # Cap TM so the VMEM footprint stays under ~36 MiB (safe on v5e/v6e/v7x).
    while tm > _LANE and _vmem_bytes_estimate(tm, size, param_bytes) > (36 << 20):
        tm = _round_up(tm // 2, _LANE)
    # Guarantee >=2 grid steps when the batch allows it so v7x's second
    # TensorCore gets work (no effect on single-TC v5e/v6e), and split the
    # batch evenly across steps to minimize padded rows.
    n_steps = pl.cdiv(b128, tm)
    if b128 >= 2 * _LANE:
        n_steps = max(n_steps, 2)
    tm = _round_up(pl.cdiv(b128, n_steps), _LANE)
    b_pad = n_steps * tm
    grid = (n_steps,)

    # ---- Wrapper-side data movement: at most ONE pass over x -----------
    # No cast here (done in-kernel); pad only if the batch isn't tile-aligned.
    x_p = x if b_pad == B else jnp.pad(x, ((0, b_pad - B), (0, 0)))

    # x streams per grid step; weights/biases are grid-invariant (VMEM-resident).
    x_spec = pl.BlockSpec((tm, size), lambda i: (i, 0))
    param_specs = [pl.BlockSpec(p.shape, lambda i: (0, 0)) for p in flat_params]
    out_spec = pl.BlockSpec((tm, 1), lambda i: (i, 0))

    # Advisory cost estimate: true (unpadded) flops, sigmoid = exp + recip.
    true_flops = 2 * B * sum(int(w.shape[0]) * int(w.shape[1]) for (w, _) in params)
    cost = pl.CostEstimate(
        flops=int(true_flops),
        transcendentals=int(2 * B),
        bytes_accessed=int(B * size * 4 + param_bytes + B * 4),
    )

    est = _vmem_bytes_estimate(tm, size, param_bytes)
    vmem_limit = int(min(max(2 * est, 16 << 20), 40 << 20))

    out = pl.pallas_call(
        mlp_kernel,
        out_shape=jax.ShapeDtypeStruct((b_pad, 1), jnp.float32),
        grid_spec=pltpu.PrefetchScalarGridSpec(
            num_scalar_prefetch=0,
            grid=grid,
            in_specs=[x_spec] + param_specs,
            out_specs=out_spec,
        ),
        compiler_params=pltpu.CompilerParams(
            dimension_semantics=("parallel",),
            vmem_limit_bytes=vmem_limit,
        ),
        cost_estimate=cost,
    )(x_p, *flat_params)

    return out[:B]


def init_params(key, size):
    """Mirror nn.Linear defaults: U(-1/sqrt(fan_in), 1/sqrt(fan_in)).

    Weights stored transposed relative to PyTorch, shape (in, out);
    biases stored as (1, out).
    """
    dims = [(size, 120), (120, 240), (240, 120), (120, 40), (40, 1)]
    params = []
    for (fan_in, fan_out) in dims:
        key, kw, kb = jax.random.split(key, 3)
        bound = 1.0 / jnp.sqrt(jnp.float32(fan_in))
        w = jax.random.uniform(kw, (fan_in, fan_out), jnp.float32, -bound, bound)
        b = jax.random.uniform(kb, (1, fan_out), jnp.float32, -bound, bound)
        params.append((w, b))
    return params


def reference_forward_f32(x, params):
    """Pure-f32 reference matching the PyTorch module exactly."""
    h = x
    for i, (w, b) in enumerate(params):
        h = h @ w + b
        if i < len(params) - 1:
            h = jnp.maximum(h, 0.0)
    return jax.nn.sigmoid(h)


def reference_forward_matched(x, flat_params):
    """Reference replicating the kernel's bf16/f32 mixed precision & padding."""
    (w1, b1, w2, b2, w3, b3, w4, b4, w5, b5) = flat_params
    h = x.astype(w1.dtype)
    for w, b in ((w1, b1), (w2, b2), (w3, b3), (w4, b4)):
        h = jnp.dot(h, w, preferred_element_type=jnp.float32) + b
        h = jnp.maximum(h, 0.0).astype(w1.dtype)
    z = jnp.dot(h, w5, preferred_element_type=jnp.float32) + b5
    return jax.nn.sigmoid(z)


if __name__ == "__main__":
    key = jax.random.PRNGKey(0)
    size = 32
    batch = 8

    key, kx = jax.random.split(key)
    x = jax.random.normal(kx, (batch, size), jnp.float32)
    params = init_params(key, size)

    out = net_forward(x, params)
    out = jax.block_until_ready(out)
    assert out.shape == (batch, 1), out.shape

    ref_matched = reference_forward_matched(x, prepare_params(params))
    ref_f32 = reference_forward_f32(x, params)
    assert jnp.allclose(out, ref_matched, atol=1e-3, rtol=1e-3), (out, ref_matched)
    assert jnp.allclose(out, ref_f32, atol=3e-2, rtol=3e-2), (out, ref_f32)

    print("KERNEL_OK")
</pallas_src>

<mosaic_0001>
module attributes {stable_mosaic.version = 11 : i64} {
  func.func @mlp_kernel(%arg0: i32, %arg1: memref<128x32xf32, #tpu.memory_space<vmem>>, %arg2: memref<32x128xbf16, #tpu.memory_space<vmem>>, %arg3: memref<1x128xf32, #tpu.memory_space<vmem>>, %arg4: memref<128x256xbf16, #tpu.memory_space<vmem>>, %arg5: memref<1x256xf32, #tpu.memory_space<vmem>>, %arg6: memref<256x128xbf16, #tpu.memory_space<vmem>>, %arg7: memref<1x128xf32, #tpu.memory_space<vmem>>, %arg8: memref<128x128xbf16, #tpu.memory_space<vmem>>, %arg9: memref<1x128xf32, #tpu.memory_space<vmem>>, %arg10: memref<128x1xbf16, #tpu.memory_space<vmem>>, %arg11: memref<1x1xf32, #tpu.memory_space<vmem>>, %arg12: memref<128x1xf32, #tpu.memory_space<vmem>>) attributes {dimension_semantics = [#tpu.dimension_semantics<parallel>], iteration_bounds = array<i64: 1>, scalar_prefetch = 0 : i64, scratch_operands = 0 : i64, tpu.core_type = #tpu.core_type<tc>, window_params = [{transform_indices = @transform_0, window_bounds = array<i64: 128, 32>}, {pipeline_mode = #tpu.pipeline_mode<synchronous>, transform_indices = @transform_1, window_bounds = array<i64: 32, 128>}, {pipeline_mode = #tpu.pipeline_mode<synchronous>, transform_indices = @transform_2, window_bounds = array<i64: 1, 128>}, {pipeline_mode = #tpu.pipeline_mode<synchronous>, transform_indices = @transform_3, window_bounds = array<i64: 128, 256>}, {pipeline_mode = #tpu.pipeline_mode<synchronous>, transform_indices = @transform_4, window_bounds = array<i64: 1, 256>}, {pipeline_mode = #tpu.pipeline_mode<synchronous>, transform_indices = @transform_5, window_bounds = array<i64: 256, 128>}, {pipeline_mode = #tpu.pipeline_mode<synchronous>, transform_indices = @transform_6, window_bounds = array<i64: 1, 128>}, {pipeline_mode = #tpu.pipeline_mode<synchronous>, transform_indices = @transform_7, window_bounds = array<i64: 128, 128>}, {pipeline_mode = #tpu.pipeline_mode<synchronous>, transform_indices = @transform_8, window_bounds = array<i64: 1, 128>}, {pipeline_mode = #tpu.pipeline_mode<synchronous>, transform_indices = @transform_9, window_bounds = array<i64: 128, 1>}, {pipeline_mode = #tpu.pipeline_mode<synchronous>, transform_indices = @transform_10, window_bounds = array<i64: 1, 1>}, {transform_indices = @transform_11, window_bounds = array<i64: 128, 1>}]} {
    %c0 = arith.constant 0 : index
    %c0_0 = arith.constant 0 : index
    %0 = vector.load %arg1[%c0, %c0_0] : memref<128x32xf32, #tpu.memory_space<vmem>>, vector<128x32xf32>
    %1 = arith.truncf %0 : vector<128x32xf32> to vector<128x32xbf16>
    %c0_1 = arith.constant 0 : index
    %c0_2 = arith.constant 0 : index
    %2 = vector.load %arg2[%c0_1, %c0_2] : memref<32x128xbf16, #tpu.memory_space<vmem>>, vector<32x128xbf16>
    %cst = arith.constant dense<0.000000e+00> : vector<128x128xf32>
    %3 = tpu.matmul %1, %2, %cst {dimension_numbers = #tpu.dot_dimension_numbers<[1], [0], [0], [1], [0, 0, 1, 1], [], []>} : vector<128x32xbf16>, vector<32x128xbf16>, vector<128x128xf32> -> vector<128x128xf32>
    %c0_3 = arith.constant 0 : index
    %c0_4 = arith.constant 0 : index
    %4 = vector.load %arg3[%c0_3, %c0_4] : memref<1x128xf32, #tpu.memory_space<vmem>>, vector<1x128xf32>
    %5 = vector.broadcast %4 : vector<1x128xf32> to vector<128x128xf32>
    %6 = arith.addf %3, %5 : vector<128x128xf32>
    %cst_5 = arith.constant 0.000000e+00 : f32
    %7 = vector.broadcast %cst_5 : f32 to vector<128x128xf32>
    %8 = arith.maximumf %6, %7 : vector<128x128xf32>
    %9 = arith.truncf %8 : vector<128x128xf32> to vector<128x128xbf16>
    %c0_6 = arith.constant 0 : index
    %c0_7 = arith.constant 0 : index
    %10 = vector.load %arg4[%c0_6, %c0_7] : memref<128x256xbf16, #tpu.memory_space<vmem>>, vector<128x256xbf16>
    %cst_8 = arith.constant dense<0.000000e+00> : vector<128x256xf32>
    %11 = tpu.matmul %9, %10, %cst_8 {dimension_numbers = #tpu.dot_dimension_numbers<[1], [0], [0], [1], [0, 0, 1, 1], [], []>} : vector<128x128xbf16>, vector<128x256xbf16>, vector<128x256xf32> -> vector<128x256xf32>
    %c0_9 = arith.constant 0 : index
    %c0_10 = arith.constant 0 : index
    %12 = vector.load %arg5[%c0_9, %c0_10] : memref<1x256xf32, #tpu.memory_space<vmem>>, vector<1x256xf32>
    %13 = vector.broadcast %12 : vector<1x256xf32> to vector<128x256xf32>
    %14 = arith.addf %11, %13 : vector<128x256xf32>
    %cst_11 = arith.constant 0.000000e+00 : f32
    %15 = vector.broadcast %cst_11 : f32 to vector<128x256xf32>
    %16 = arith.maximumf %14, %15 : vector<128x256xf32>
    %17 = arith.truncf %16 : vector<128x256xf32> to vector<128x256xbf16>
    %c0_12 = arith.constant 0 : index
    %c0_13 = arith.constant 0 : index
    %18 = vector.load %arg6[%c0_12, %c0_13] : memref<256x128xbf16, #tpu.memory_space<vmem>>, vector<256x128xbf16>
    %cst_14 = arith.constant dense<0.000000e+00> : vector<128x128xf32>
    %19 = tpu.matmul %17, %18, %cst_14 {dimension_numbers = #tpu.dot_dimension_numbers<[1], [0], [0], [1], [0, 0, 1, 1], [], []>} : vector<128x256xbf16>, vector<256x128xbf16>, vector<128x128xf32> -> vector<128x128xf32>
    %c0_15 = arith.constant 0 : index
    %c0_16 = arith.constant 0 : index
    %20 = vector.load %arg7[%c0_15, %c0_16] : memref<1x128xf32, #tpu.memory_space<vmem>>, vector<1x128xf32>
    %21 = vector.broadcast %20 : vector<1x128xf32> to vector<128x128xf32>
    %22 = arith.addf %19, %21 : vector<128x128xf32>
    %cst_17 = arith.constant 0.000000e+00 : f32
    %23 = vector.broadcast %cst_17 : f32 to vector<128x128xf32>
    %24 = arith.maximumf %22, %23 : vector<128x128xf32>
    %25 = arith.truncf %24 : vector<128x128xf32> to vector<128x128xbf16>
    %c0_18 = arith.constant 0 : index
    %c0_19 = arith.constant 0 : index
    %26 = vector.load %arg8[%c0_18, %c0_19] : memref<128x128xbf16, #tpu.memory_space<vmem>>, vector<128x128xbf16>
    %cst_20 = arith.constant dense<0.000000e+00> : vector<128x128xf32>
    %27 = tpu.matmul %25, %26, %cst_20 {dimension_numbers = #tpu.dot_dimension_numbers<[1], [0], [0], [1], [0, 0, 1, 1], [], []>} : vector<128x128xbf16>, vector<128x128xbf16>, vector<128x128xf32> -> vector<128x128xf32>
    %c0_21 = arith.constant 0 : index
    %c0_22 = arith.constant 0 : index
    %28 = vector.load %arg9[%c0_21, %c0_22] : memref<1x128xf32, #tpu.memory_space<vmem>>, vector<1x128xf32>
    %29 = vector.broadcast %28 : vector<1x128xf32> to vector<128x128xf32>
    %30 = arith.addf %27, %29 : vector<128x128xf32>
    %cst_23 = arith.constant 0.000000e+00 : f32
    %31 = vector.broadcast %cst_23 : f32 to vector<128x128xf32>
    %32 = arith.maximumf %30, %31 : vector<128x128xf32>
    %33 = arith.truncf %32 : vector<128x128xf32> to vector<128x128xbf16>
    %c0_24 = arith.constant 0 : index
    %c0_25 = arith.constant 0 : index
    %34 = vector.load %arg10[%c0_24, %c0_25] : memref<128x1xbf16, #tpu.memory_space<vmem>>, vector<128x1xbf16>
    %cst_26 = arith.constant dense<0.000000e+00> : vector<128x1xf32>
    %35 = tpu.matmul %33, %34, %cst_26 {dimension_numbers = #tpu.dot_dimension_numbers<[1], [0], [0], [1], [0, 0, 1, 1], [], []>} : vector<128x128xbf16>, vector<128x1xbf16>, vector<128x1xf32> -> vector<128x1xf32>
    %c0_27 = arith.constant 0 : index
    %c0_28 = arith.constant 0 : index
    %36 = vector.load %arg11[%c0_27, %c0_28] : memref<1x1xf32, #tpu.memory_space<vmem>>, vector<1x1xf32>
    %37 = vector.broadcast %36 : vector<1x1xf32> to vector<128x1xf32>
    %38 = arith.addf %35, %37 : vector<128x1xf32>
    %39 = arith.negf %38 : vector<128x1xf32>
    %40 = math.exp %39 : vector<128x1xf32>
    %cst_29 = arith.constant 1.000000e+00 : f32
    %41 = vector.broadcast %cst_29 : f32 to vector<128x1xf32>
    %42 = arith.addf %41, %40 : vector<128x1xf32>
    %43 = arith.divf %41, %42 : vector<128x1xf32>
    %c0_30 = arith.constant 0 : index
    %c0_31 = arith.constant 0 : index
    %44 = vector.load %arg12[%c0_30, %c0_31] : memref<128x1xf32, #tpu.memory_space<vmem>>, vector<128x1xf32>
    tpu.vector_store %arg12[%c0_30, %c0_31], %43 {strides = array<i32>} : memref<128x1xf32, #tpu.memory_space<vmem>>, vector<128x1xf32>,
    return
  }
  func.func @transform_0(%arg0: i32) -> (i32, i32) {
    %c0_i32 = arith.constant 0 : i32
    %c0_i32_0 = arith.constant 0 : i32
    return %arg0, %c0_i32 : i32, i32
  }
  func.func @transform_1(%arg0: i32) -> (i32, i32) {
    %c0_i32 = arith.constant 0 : i32
    %c0_i32_0 = arith.constant 0 : i32
    %c0_i32_1 = arith.constant 0 : i32
    return %c0_i32, %c0_i32_0 : i32, i32
  }
  func.func @transform_2(%arg0: i32) -> (i32, i32) {
    %c0_i32 = arith.constant 0 : i32
    %c0_i32_0 = arith.constant 0 : i32
    %c0_i32_1 = arith.constant 0 : i32
    return %c0_i32, %c0_i32_0 : i32, i32
  }
  func.func @transform_3(%arg0: i32) -> (i32, i32) {
    %c0_i32 = arith.constant 0 : i32
    %c0_i32_0 = arith.constant 0 : i32
    %c0_i32_1 = arith.constant 0 : i32
    return %c0_i32, %c0_i32_0 : i32, i32
  }
  func.func @transform_4(%arg0: i32) -> (i32, i32) {
    %c0_i32 = arith.constant 0 : i32
    %c0_i32_0 = arith.constant 0 : i32
    %c0_i32_1 = arith.constant 0 : i32
    return %c0_i32, %c0_i32_0 : i32, i32
  }
  func.func @transform_5(%arg0: i32) -> (i32, i32) {
    %c0_i32 = arith.constant 0 : i32
    %c0_i32_0 = arith.constant 0 : i32
    %c0_i32_1 = arith.constant 0 : i32
    return %c0_i32, %c0_i32_0 : i32, i32
  }
  func.func @transform_6(%arg0: i32) -> (i32, i32) {
    %c0_i32 = arith.constant 0 : i32
    %c0_i32_0 = arith.constant 0 : i32
    %c0_i32_1 = arith.constant 0 : i32
    return %c0_i32, %c0_i32_0 : i32, i32
  }
  func.func @transform_7(%arg0: i32) -> (i32, i32) {
    %c0_i32 = arith.constant 0 : i32
    %c0_i32_0 = arith.constant 0 : i32
    %c0_i32_1 = arith.constant 0 : i32
    return %c0_i32, %c0_i32_0 : i32, i32
  }
  func.func @transform_8(%arg0: i32) -> (i32, i32) {
    %c0_i32 = arith.constant 0 : i32
    %c0_i32_0 = arith.constant 0 : i32
    %c0_i32_1 = arith.constant 0 : i32
    return %c0_i32, %c0_i32_0 : i32, i32
  }
  func.func @transform_9(%arg0: i32) -> (i32, i32) {
    %c0_i32 = arith.constant 0 : i32
    %c0_i32_0 = arith.constant 0 : i32
    %c0_i32_1 = arith.constant 0 : i32
    return %c0_i32, %c0_i32_0 : i32, i32
  }
  func.func @transform_10(%arg0: i32) -> (i32, i32) {
    %c0_i32 = arith.constant 0 : i32
    %c0_i32_0 = arith.constant 0 : i32
    %c0_i32_1 = arith.constant 0 : i32
    return %c0_i32, %c0_i32_0 : i32, i32
  }
  func.func @transform_11(%arg0: i32) -> (i32, i32) {
    %c0_i32 = arith.constant 0 : i32
    %c0_i32_0 = arith.constant 0 : i32
    return %arg0, %c0_i32 : i32, i32
  }
}

</mosaic_0001>

<llo_original>
// kernel: tpu_custom_call.1
$region0: #{tpu_custom_call.1}
  #allocation0 [shape = 'u32[]', space=smem, size = 0x4, offset = 0x4, fixed_abs, tag = 'smem constant byte address 0x4 - core index']
  #allocation1 [shape = 'u32[144,128]{1,0:T(1,128)}', space=vmem, size = 0x12000, scoped, tag = 'internal scratch']
  #allocation2 [shape = 'f32[1,1]{1,0:T(1,128)S(1)}', space=vmem, size = 0x200, scoped, tag = 'scoped memory for tpu_custom_call.1']
  %s0 = inlined_call_operand.vmem [shape: f32[128,32], index: 0, kind: input, shape index: {}]
  %s1 = inlined_call_operand.vmem [shape: bf16[32,128], index: 1, kind: input, shape index: {}]
  %s2 = inlined_call_operand.vmem [shape: f32[1,128], index: 2, kind: input, shape index: {}]
  %s3 = inlined_call_operand.vmem [shape: bf16[128,256], index: 3, kind: input, shape index: {}]
  %s4 = inlined_call_operand.vmem [shape: f32[1,256], index: 4, kind: input, shape index: {}]
  %s5 = inlined_call_operand.hbm [shape: bf16[256,128], index: 5, kind: input, shape index: {}]
  %s6 = inlined_call_operand.vmem [shape: f32[1,128], index: 6, kind: input, shape index: {}]
  %s7 = inlined_call_operand.vmem [shape: bf16[128,128], index: 7, kind: input, shape index: {}]
  %s8 = inlined_call_operand.vmem [shape: f32[1,128], index: 8, kind: input, shape index: {}]
  %s9 = inlined_call_operand.vmem [shape: bf16[128,1], index: 9, kind: input, shape index: {}]
  %s10 = inlined_call_operand.<no memory space> [shape: f32[1,1], index: 10, kind: input, shape index: {}]
  %s11 = inlined_call_operand.vmem [shape: f32[128,1], index: 11, kind: output, shape index: {}]
  %s12 = sld [smem:[#allocation0]]
  $region58: #{tpu_custom_call.1} parent=0
    _
  %s14 = ssub.s32 1, %s12
  %s15 = scalar_select 0, %s14, %s12
  %v16 = vstv %s10
  %17 = vst [vmem:[#allocation2] sm:$0x1] %v16
  $region1: #{tpu_custom_call.1} parent=0
    #allocation3 [shape = 'u8[65536]{0}', space=vmem, size = 0x10000, scoped, tag = 'input window, operand 5, single buffered']
    #allocation4 [shape = 's32[1]{0}', space=sflag, size = 0x4, scoped, tag = 'scoped memory for tpu_custom_call.1']
    %18 = vsyncpa [#allocation4], 0
    // Predicated region
    $region2: #{tpu_custom_call.1} parent=1 // pred_check
      _
    $region3: #{tpu_custom_call.1} parent=1 // pred_check_branch
      %20 = sbr.rel (0) target = $region5
    $region4: #{tpu_custom_call.1} parent=1 // pred_region
      _
    $region5: #{tpu_custom_call.1} parent=1 // pred_fallthru
      _
    // Predicated region
    $region6: #{tpu_custom_call.1} parent=1 // pred_check
      _
    $region7: #{tpu_custom_call.1} parent=1 // pred_check_branch
      %22 = sbr.rel (0) target = $region9
    $region8: #{tpu_custom_call.1} parent=1 // pred_region
      _
    $region9: #{tpu_custom_call.1} parent=1 // pred_fallthru
      _
    // Predicated region
    $region10: #{tpu_custom_call.1} parent=1 // pred_check
      _
    $region11: #{tpu_custom_call.1} parent=1 // pred_check_branch
      %24 = sbr.rel (0) target = $region13
    $region12: #{tpu_custom_call.1} parent=1 // pred_region
      _
    $region13: #{tpu_custom_call.1} parent=1 // pred_fallthru
      _
    // Predicated region
    $region14: #{tpu_custom_call.1} parent=1 // pred_check
      _
    $region15: #{tpu_custom_call.1} parent=1 // pred_check_branch
      %26 = sbr.rel (0) target = $region17
    $region16: #{tpu_custom_call.1} parent=1 // pred_region
      _
    $region17: #{tpu_custom_call.1} parent=1 // pred_fallthru
      _
    // Predicated region
    $region18: #{tpu_custom_call.1} parent=1 // pred_check
      _
    $region19: #{tpu_custom_call.1} parent=1 // pred_check_branch
      %28 = sbr.rel (0) target = $region21
    $region20: #{tpu_custom_call.1} parent=1 // pred_region
      _
    $region21: #{tpu_custom_call.1} parent=1 // pred_fallthru
      _
    // Predicated region
    $region22: #{tpu_custom_call.1} parent=1 // pred_check
      _
    $region23: #{tpu_custom_call.1} parent=1 // pred_check_branch
      %30 = sbr.rel (0) target = $region25
    $region24: #{tpu_custom_call.1} parent=1 // pred_region
      %s32 = ssub.s32 2048, 2048
      %33 = vsyncadd [#allocation4], %s32
      %s34 = sshll.u32 [#allocation3], 4
      %s35 = int_to_ptr.vmem [resolvable:$true] %s34
      %40 = dma.hbm_to_vmem [thread:$0]  %s5, 2048, %s35, [#allocation4], 64, 64, 4
    $region25: #{tpu_custom_call.1} parent=1 // pred_fallthru
      _
    // Predicated region
    $region26: #{tpu_custom_call.1} parent=1 // pred_check
      _
    $region27: #{tpu_custom_call.1} parent=1 // pred_check_branch
      %42 = sbr.rel (0) target = $region29
    $region28: #{tpu_custom_call.1} parent=1 // pred_region
      _
    $region29: #{tpu_custom_call.1} parent=1 // pred_fallthru
      _
    // Predicated region
    $region30: #{tpu_custom_call.1} parent=1 // pred_check
      _
    $region31: #{tpu_custom_call.1} parent=1 // pred_check_branch
      %44 = sbr.rel (0) target = $region33
    $region32: #{tpu_custom_call.1} parent=1 // pred_region
      _
    $region33: #{tpu_custom_call.1} parent=1 // pred_fallthru
      _
    // Predicated region
    $region34: #{tpu_custom_call.1} parent=1 // pred_check
      _
    $region35: #{tpu_custom_call.1} parent=1 // pred_check_branch
      %46 = sbr.rel (0) target = $region37
    $region36: #{tpu_custom_call.1} parent=1 // pred_region
      _
    $region37: #{tpu_custom_call.1} parent=1 // pred_fallthru
      _
    // Predicated region
    $region38: #{tpu_custom_call.1} parent=1 // pred_check
      _
    $region39: #{tpu_custom_call.1} parent=1 // pred_check_branch
      %48 = sbr.rel (0) target = $region41
    $region40: #{tpu_custom_call.1} parent=1 // pred_region
      _
    $region41: #{tpu_custom_call.1} parent=1 // pred_fallthru
      _
    // Predicated region
    $region42: #{tpu_custom_call.1} parent=1 // pred_check
      _
    $region43: #{tpu_custom_call.1} parent=1 // pred_check_branch
      %50 = sbr.rel (0) target = $region45
    $region44: #{tpu_custom_call.1} parent=1 // pred_region
      _
    $region45: #{tpu_custom_call.1} parent=1 // pred_fallthru
      _
    // Predicated region
    $region46: #{tpu_custom_call.1} parent=1 // pred_check
      _
    $region47: #{tpu_custom_call.1} parent=1 // pred_check_branch
      %52 = sbr.rel (0) target = $region49
    $region48: #{tpu_custom_call.1} parent=1 // pred_region
      %53 = dma.done [#allocation4], 2048
    $region49: #{tpu_custom_call.1} parent=1 // pred_fallthru
      _
    %v55 = vld [vmem:[%s0] sm:$0xff]
    %v56 = vld [vmem:[%s0 + $0x8] sm:$0xff]
    %v57 = vld [vmem:[%s0 + $0x10] sm:$0xff]
    %v58 = vld [vmem:[%s0 + $0x18] sm:$0xff]
    %v59 = vld [vmem:[%s0 + $0x20] sm:$0xff]
    %v60 = vld [vmem:[%s0 + $0x28] sm:$0xff]
    %v61 = vld [vmem:[%s0 + $0x30] sm:$0xff]
    %v62 = vld [vmem:[%s0 + $0x38] sm:$0xff]
    %v63 = vld [vmem:[%s0 + $0x40] sm:$0xff]
    %v64 = vld [vmem:[%s0 + $0x48] sm:$0xff]
    %v65 = vld [vmem:[%s0 + $0x50] sm:$0xff]
    %v66 = vld [vmem:[%s0 + $0x58] sm:$0xff]
    %v67 = vld [vmem:[%s0 + $0x60] sm:$0xff]
    %v68 = vld [vmem:[%s0 + $0x68] sm:$0xff]
    %v69 = vld [vmem:[%s0 + $0x70] sm:$0xff]
    %v70 = vld [vmem:[%s0 + $0x78] sm:$0xff]
    %v71 = vpack.c.bf16 %v56, %v55
    %v72 = vpack.c.bf16 %v58, %v57
    %v73 = vpack.c.bf16 %v60, %v59
    %v74 = vpack.c.bf16 %v62, %v61
    %v75 = vpack.c.bf16 %v64, %v63
    %v76 = vpack.c.bf16 %v66, %v65
    %v77 = vpack.c.bf16 %v68, %v67
    %v78 = vpack.c.bf16 %v70, %v69
    %v79 = vld [vmem:[%s1] sm:$0xf]
    %v80 = vld [vmem:[%s1 + $0x4] sm:$0xf]
    %v81 = vld [vmem:[%s1 + $0x8] sm:$0xf]
    %v82 = vld [vmem:[%s1 + $0xc] sm:$0xf]
    %v83 = vld [vmem:[%s2] sm:$0x1]
    %v85 = vlaneseq
    %v86 = vshrl.u32 %v85, 7
    %v87 = vsub.s32 0, %v86
    %v88 = vrot.slane %v83, %v87
    %v94 = vunpack.c.l.b16 %v79
    %v95 = vunpack.c.l.b16 %v80
    %v96 = vunpack.c.l.b16 %v81
    %v97 = vunpack.c.l.b16 %v82
    %v98 = vpack.c.b16 %v95, %v94
    %v99 = vpack.c.b16 %v97, %v96
    %vm102 = vcmask 261120
    %v104 = vsel %vm102, %v71, 0
    %v107 = vsel %vm102, %v72, 0
    %v110 = vsel %vm102, %v73, 0
    %v113 = vsel %vm102, %v74, 0
    %v116 = vsel %vm102, %v75, 0
    %v119 = vsel %vm102, %v76, 0
    %v122 = vsel %vm102, %v77, 0
    %v125 = vsel %vm102, %v78, 0
    %127 = vmatprep.subr.bf16.mxu0 0
    %128 = vmatpush1.bf16.msra.mxu0 0
    %129 = vmatprep.subr.bf16.mxu0 0
    %130 = vmatpush1.bf16.msra.mxu0 0
    %131 = vmatprep.subr.bf16.mxu0 0
    %132 = vmatpush1.bf16.msra.mxu0 0
    %133 = vmatprep.subr.bf16.mxu0 0
    %134 = vmatpush1.bf16.msra.mxu0 0
    %135 = vmatprep.subr.bf16.mxu0 0
    %136 = vmatpush1.bf16.msra.mxu0 0
    %137 = vmatprep.subr.bf16.mxu0 0
    %138 = vmatpush1.bf16.msra.mxu0 0
    %139 = vmatprep.subr.bf16.mxu0 0
    %140 = vmatpush1.bf16.msra.mxu0 %v99
    %141 = vmatprep.subr.bf16.mxu0 0
    %142 = vmatpush1.bf16.msra.mxu0 %v98
    %143 = vmatprep.subr.bf16.mxu0 0
    %144 = vmatpush2.bf16.msra.mxu0 0
    %145 = vmatprep.subr.bf16.mxu0 0
    %146 = vmatpush2.bf16.msra.mxu0 0
    %147 = vmatprep.subr.bf16.mxu0 0
    %148 = vmatpush2.bf16.msra.mxu0 0
    %149 = vmatprep.subr.bf16.mxu0 0
    %150 = vmatpush2.bf16.msra.mxu0 0
    %151 = vmatprep.subr.bf16.mxu0 0
    %152 = vmatpush2.bf16.msra.mxu0 0
    %153 = vmatprep.subr.bf16.mxu0 0
    %154 = vmatpush2.bf16.msra.mxu0 0
    %155 = vmatprep.subr.bf16.mxu0 0
    %156 = vmatpush2.bf16.msra.mxu0 0
    %157 = vmatprep.subr.bf16.mxu0 0
    %158 = vmatpush2.bf16.msra.mxu0 0
    %159 = vmatprep.mubr.bf16.mxu0 0
    %160 = vmatmul.mubr.bf16.gmra.mxu0 %v104
    %v161 = vpop.f32.mrf.mxu0
    %v162 = vadd.f32 %v88, %v161
    %v163 = vpop.f32.mrf.mxu0
    %v164 = vpop.f32.mrf.mxu0
    %v165 = vadd.f32 %v88, %v164
    %v166 = vpop.f32.mrf.mxu0
    %167 = vmatprep.mubr.bf16.mxu0 0
    %168 = vmatmul.mubr.bf16.gmra.mxu0 %v107
    %v169 = vpop.f32.mrf.mxu0
    %v170 = vadd.f32 %v88, %v169
    %v171 = vpop.f32.mrf.mxu0
    %v172 = vpop.f32.mrf.mxu0
    %v173 = vadd.f32 %v88, %v172
    %v174 = vpop.f32.mrf.mxu0
    %175 = vmatprep.mubr.bf16.mxu0 0
    %176 = vmatmul.mubr.bf16.gmra.mxu0 %v110
    %v177 = vpop.f32.mrf.mxu0
    %v178 = vadd.f32 %v88, %v177
    %v179 = vpop.f32.mrf.mxu0
    %v180 = vpop.f32.mrf.mxu0
    %v181 = vadd.f32 %v88, %v180
    %v182 = vpop.f32.mrf.mxu0
    %183 = vmatprep.mubr.bf16.mxu0 0
    %184 = vmatmul.mubr.bf16.gmra.mxu0 %v113
    %v185 = vpop.f32.mrf.mxu0
    %v186 = vadd.f32 %v88, %v185
    %v187 = vpop.f32.mrf.mxu0
    %v188 = vpop.f32.mrf.mxu0
    %v189 = vadd.f32 %v88, %v188
    %v190 = vpop.f32.mrf.mxu0
    %191 = vmatprep.mubr.bf16.mxu0 0
    %192 = vmatmul.mubr.bf16.gmra.mxu0 %v116
    %v193 = vpop.f32.mrf.mxu0
    %v194 = vadd.f32 %v88, %v193
    %v195 = vpop.f32.mrf.mxu0
    %v196 = vpop.f32.mrf.mxu0
    %v197 = vadd.f32 %v88, %v196
    %v198 = vpop.f32.mrf.mxu0
    %199 = vmatprep.mubr.bf16.mxu0 0
    %200 = vmatmul.mubr.bf16.gmra.mxu0 %v119
    %v201 = vpop.f32.mrf.mxu0
    %v202 = vadd.f32 %v88, %v201
    %v203 = vpop.f32.mrf.mxu0
    %v204 = vpop.f32.mrf.mxu0
    %v205 = vadd.f32 %v88, %v204
    %v206 = vpop.f32.mrf.mxu0
    %207 = vmatprep.mubr.bf16.mxu0 0
    %208 = vmatmul.mubr.bf16.gmra.mxu0 %v122
    %v209 = vpop.f32.mrf.mxu0
    %v210 = vadd.f32 %v88, %v209
    %v211 = vpop.f32.mrf.mxu0
    %v212 = vpop.f32.mrf.mxu0
    %v213 = vadd.f32 %v88, %v212
    %v214 = vpop.f32.mrf.mxu0
    %215 = vmatprep.mubr.bf16.mxu0 0
    %216 = vmatmul.mubr.bf16.gmra.mxu0 %v125
    %v217 = vpop.f32.mrf.mxu0
    %v218 = vadd.f32 %v88, %v217
    %v219 = vpop.f32.mrf.mxu0
    %v220 = vpop.f32.mrf.mxu0
    %v221 = vadd.f32 %v88, %v220
    %v222 = vpop.f32.mrf.mxu0
    %223 = vdwg.mxu0
    %v224 = vmax.f32 %v162, 0.0
    %v225 = vmax.f32 %v165, 0.0
    %v226 = vmax.f32 %v170, 0.0
    %v227 = vmax.f32 %v173, 0.0
    %v228 = vmax.f32 %v178, 0.0
    %v229 = vmax.f32 %v181, 0.0
    %v230 = vmax.f32 %v186, 0.0
    %v231 = vmax.f32 %v189, 0.0
    %v232 = vmax.f32 %v194, 0.0
    %v233 = vmax.f32 %v197, 0.0
    %v234 = vmax.f32 %v202, 0.0
    %v235 = vmax.f32 %v205, 0.0
    %v236 = vmax.f32 %v210, 0.0
    %v237 = vmax.f32 %v213, 0.0
    %v238 = vmax.f32 %v218, 0.0
    %v239 = vmax.f32 %v221, 0.0
    %v240 = vpack.c.bf16 %v225, %v224
    %v241 = vpack.c.bf16 %v227, %v226
    %v242 = vpack.c.bf16 %v229, %v228
    %v243 = vpack.c.bf16 %v231, %v230
    %v244 = vpack.c.bf16 %v233, %v232
    %v245 = vpack.c.bf16 %v235, %v234
    %v246 = vpack.c.bf16 %v237, %v236
    %v247 = vpack.c.bf16 %v239, %v238
    %v248 = vld [vmem:[%s3] sm:$0xff]
    %v249 = vld [vmem:[%s3 + $0x8] sm:$0xff]
    %v250 = vld [vmem:[%s3 + $0x10] sm:$0xff]
    %v251 = vld [vmem:[%s3 + $0x18] sm:$0xff]
    %v252 = vld [vmem:[%s3 + $0x20] sm:$0xff]
    %v253 = vld [vmem:[%s3 + $0x28] sm:$0xff]
    %v254 = vld [vmem:[%s3 + $0x30] sm:$0xff]
    %v255 = vld [vmem:[%s3 + $0x38] sm:$0xff]
    %v256 = vld [vmem:[%s3 + $0x40] sm:$0xff]
    %v257 = vld [vmem:[%s3 + $0x48] sm:$0xff]
    %v258 = vld [vmem:[%s3 + $0x50] sm:$0xff]
    %v259 = vld [vmem:[%s3 + $0x58] sm:$0xff]
    %v260 = vld [vmem:[%s3 + $0x60] sm:$0xff]
    %v261 = vld [vmem:[%s3 + $0x68] sm:$0xff]
    %v262 = vld [vmem:[%s3 + $0x70] sm:$0xff]
    %v263 = vld [vmem:[%s3 + $0x78] sm:$0xff]
    %v264 = vld [vmem:[%s4] sm:$0x3]
    %v266 = vlaneseq
    %v267 = vshrl.u32 %v266, 7
    %v268 = vsub.s32 0, %v267
    %v269 = vrot.slane %v264, %v268
    %v270 = vlaneseq
    %v271 = vshrl.u32 %v270, 7
    %v272 = vsub.s32 1, %v271
    %v273 = vrot.slane %v264, %v272
    %v292 = vunpack.c.l.b16 %v248
    %v293 = vunpack.c.h.b16 %v248
    %v294 = vunpack.c.l.b16 %v249
    %v295 = vunpack.c.h.b16 %v249
    %v296 = vunpack.c.l.b16 %v250
    %v297 = vunpack.c.h.b16 %v250
    %v298 = vunpack.c.l.b16 %v251
    %v299 = vunpack.c.h.b16 %v251
    %v300 = vunpack.c.l.b16 %v252
    %v301 = vunpack.c.h.b16 %v252
    %v302 = vunpack.c.l.b16 %v253
    %v303 = vunpack.c.h.b16 %v253
    %v304 = vunpack.c.l.b16 %v254
    %v305 = vunpack.c.h.b16 %v254
    %v306 = vunpack.c.l.b16 %v255
    %v307 = vunpack.c.h.b16 %v255
    %v308 = vunpack.c.l.b16 %v256
    %v309 = vunpack.c.h.b16 %v256
    %v310 = vunpack.c.l.b16 %v257
    %v311 = vunpack.c.h.b16 %v257
    %v312 = vunpack.c.l.b16 %v258
    %v313 = vunpack.c.h.b16 %v258
    %v314 = vunpack.c.l.b16 %v259
    %v315 = vunpack.c.h.b16 %v259
    %v316 = vunpack.c.l.b16 %v260
    %v317 = vunpack.c.h.b16 %v260
    %v318 = vunpack.c.l.b16 %v261
    %v319 = vunpack.c.h.b16 %v261
    %v320 = vunpack.c.l.b16 %v262
    %v321 = vunpack.c.h.b16 %v262
    %v322 = vunpack.c.l.b16 %v263
    %v323 = vunpack.c.h.b16 %v263
    %v324 = vpack.c.b16 %v294, %v292
    %v325 = vpack.c.b16 %v295, %v293
    %v326 = vpack.c.b16 %v298, %v296
    %v327 = vpack.c.b16 %v299, %v297
    %v328 = vpack.c.b16 %v302, %v300
    %v329 = vpack.c.b16 %v303, %v301
    %v330 = vpack.c.b16 %v306, %v304
    %v331 = vpack.c.b16 %v307, %v305
    %v332 = vpack.c.b16 %v310, %v308
    %v333 = vpack.c.b16 %v311, %v309
    %v334 = vpack.c.b16 %v314, %v312
    %v335 = vpack.c.b16 %v315, %v313
    %v336 = vpack.c.b16 %v318, %v316
    %v337 = vpack.c.b16 %v319, %v317
    %v338 = vpack.c.b16 %v322, %v320
    %v339 = vpack.c.b16 %v323, %v321
    %356 = vmatprep.subr.bf16.mxu0 %v339
    %357 = vmatpush1.bf16.msra.mxu0 %v338
    %358 = vmatprep.subr.bf16.mxu0 %v337
    %359 = vmatpush1.bf16.msra.mxu0 %v336
    %360 = vmatprep.subr.bf16.mxu0 %v335
    %361 = vmatpush1.bf16.msra.mxu0 %v334
    %362 = vmatprep.subr.bf16.mxu0 %v333
    %363 = vmatpush1.bf16.msra.mxu0 %v332
    %364 = vmatprep.subr.bf16.mxu0 %v331
    %365 = vmatpush1.bf16.msra.mxu0 %v330
    %366 = vmatprep.subr.bf16.mxu0 %v329
    %367 = vmatpush1.bf16.msra.mxu0 %v328
    %368 = vmatprep.subr.bf16.mxu0 %v327
    %369 = vmatpush1.bf16.msra.mxu0 %v326
    %370 = vmatprep.subr.bf16.mxu0 %v325
    %371 = vmatpush1.bf16.msra.mxu0 %v324
    %372 = vmatprep.subr.bf16.mxu0 0
    %373 = vmatpush2.bf16.msra.mxu0 0
    %374 = vmatprep.subr.bf16.mxu0 0
    %375 = vmatpush2.bf16.msra.mxu0 0
    %376 = vmatprep.subr.bf16.mxu0 0
    %377 = vmatpush2.bf16.msra.mxu0 0
    %378 = vmatprep.subr.bf16.mxu0 0
    %379 = vmatpush2.bf16.msra.mxu0 0
    %380 = vmatprep.subr.bf16.mxu0 0
    %381 = vmatpush2.bf16.msra.mxu0 0
    %382 = vmatprep.subr.bf16.mxu0 0
    %383 = vmatpush2.bf16.msra.mxu0 0
    %384 = vmatprep.subr.bf16.mxu0 0
    %385 = vmatpush2.bf16.msra.mxu0 0
    %386 = vmatprep.subr.bf16.mxu0 0
    %387 = vmatpush2.bf16.msra.mxu0 0
    %388 = vmatprep.mubr.bf16.mxu0 0
    %389 = vmatmul.mubr.bf16.gmra.mxu0 %v240
    %v390 = vpop.f32.mrf.mxu0
    %v391 = vadd.f32 %v269, %v390
    %v392 = vpop.f32.mrf.mxu0
    %v393 = vadd.f32 %v273, %v392
    %v394 = vpop.f32.mrf.mxu0
    %v395 = vadd.f32 %v269, %v394
    %v396 = vpop.f32.mrf.mxu0
    %v397 = vadd.f32 %v273, %v396
    %398 = vmatprep.mubr.bf16.mxu0 0
    %399 = vmatmul.mubr.bf16.gmra.mxu0 %v241
    %v400 = vpop.f32.mrf.mxu0
    %v401 = vadd.f32 %v269, %v400
    %v402 = vpop.f32.mrf.mxu0
    %v403 = vadd.f32 %v273, %v402
    %v404 = vpop.f32.mrf.mxu0
    %v405 = vadd.f32 %v269, %v404
    %v406 = vpop.f32.mrf.mxu0
    %v407 = vadd.f32 %v273, %v406
    %408 = vmatprep.mubr.bf16.mxu0 0
    %409 = vmatmul.mubr.bf16.gmra.mxu0 %v242
    %v410 = vpop.f32.mrf.mxu0
    %v411 = vadd.f32 %v269, %v410
    %v412 = vpop.f32.mrf.mxu0
    %v413 = vadd.f32 %v273, %v412
    %v414 = vpop.f32.mrf.mxu0
    %v415 = vadd.f32 %v269, %v414
    %v416 = vpop.f32.mrf.mxu0
    %v417 = vadd.f32 %v273, %v416
    %418 = vmatprep.mubr.bf16.mxu0 0
    %419 = vmatmul.mubr.bf16.gmra.mxu0 %v243
    %v420 = vpop.f32.mrf.mxu0
    %v421 = vadd.f32 %v269, %v420
    %v422 = vpop.f32.mrf.mxu0
    %v423 = vadd.f32 %v273, %v422
    %v424 = vpop.f32.mrf.mxu0
    %v425 = vadd.f32 %v269, %v424
    %v426 = vpop.f32.mrf.mxu0
    %v427 = vadd.f32 %v273, %v426
    %428 = vmatprep.mubr.bf16.mxu0 0
    %429 = vmatmul.mubr.bf16.gmra.mxu0 %v244
    %v430 = vpop.f32.mrf.mxu0
    %v431 = vadd.f32 %v269, %v430
    %v432 = vpop.f32.mrf.mxu0
    %v433 = vadd.f32 %v273, %v432
    %v434 = vpop.f32.mrf.mxu0
    %v435 = vadd.f32 %v269, %v434
    %v436 = vpop.f32.mrf.mxu0
    %v437 = vadd.f32 %v273, %v436
    %438 = vmatprep.mubr.bf16.mxu0 0
    %439 = vmatmul.mubr.bf16.gmra.mxu0 %v245
    %v440 = vpop.f32.mrf.mxu0
    %v441 = vadd.f32 %v269, %v440
    %v442 = vpop.f32.mrf.mxu0
    %v443 = vadd.f32 %v273, %v442
    %v444 = vpop.f32.mrf.mxu0
    %v445 = vadd.f32 %v269, %v444
    %v446 = vpop.f32.mrf.mxu0
    %v447 = vadd.f32 %v273, %v446
    %448 = vmatprep.mubr.bf16.mxu0 0
    %449 = vmatmul.mubr.bf16.gmra.mxu0 %v246
    %v450 = vpop.f32.mrf.mxu0
    %v451 = vadd.f32 %v269, %v450
    %v452 = vpop.f32.mrf.mxu0
    %v453 = vadd.f32 %v273, %v452
    %v454 = vpop.f32.mrf.mxu0
    %v455 = vadd.f32 %v269, %v454
    %v456 = vpop.f32.mrf.mxu0
    %v457 = vadd.f32 %v273, %v456
    %458 = vmatprep.mubr.bf16.mxu0 0
    %459 = vmatmul.mubr.bf16.gmra.mxu0 %v247
    %v460 = vpop.f32.mrf.mxu0
    %v461 = vadd.f32 %v269, %v460
    %v462 = vpop.f32.mrf.mxu0
    %v463 = vadd.f32 %v273, %v462
    %v464 = vpop.f32.mrf.mxu0
    %v465 = vadd.f32 %v269, %v464
    %v466 = vpop.f32.mrf.mxu0
    %v467 = vadd.f32 %v273, %v466
    %468 = vdwg.mxu0
    %v469 = vmax.f32 %v391, 0.0
    %v470 = vmax.f32 %v393, 0.0
    %v471 = vmax.f32 %v395, 0.0
    %v472 = vmax.f32 %v397, 0.0
    %v473 = vmax.f32 %v401, 0.0
    %v474 = vmax.f32 %v403, 0.0
    %v475 = vmax.f32 %v405, 0.0
    %v476 = vmax.f32 %v407, 0.0
    %v477 = vmax.f32 %v411, 0.0
    %v478 = vmax.f32 %v413, 0.0
    %v479 = vmax.f32 %v415, 0.0
    %v480 = vmax.f32 %v417, 0.0
    %v481 = vmax.f32 %v421, 0.0
    %v482 = vmax.f32 %v423, 0.0
    %v483 = vmax.f32 %v425, 0.0
    %v484 = vmax.f32 %v427, 0.0
    %v485 = vmax.f32 %v431, 0.0
    %v486 = vmax.f32 %v433, 0.0
    %v487 = vmax.f32 %v435, 0.0
    %v488 = vmax.f32 %v437, 0.0
    %v489 = vmax.f32 %v441, 0.0
    %v490 = vmax.f32 %v443, 0.0
    %v491 = vmax.f32 %v445, 0.0
    %v492 = vmax.f32 %v447, 0.0
    %v493 = vmax.f32 %v451, 0.0
    %v494 = vmax.f32 %v453, 0.0
    %v495 = vmax.f32 %v455, 0.0
    %v496 = vmax.f32 %v457, 0.0
    %v497 = vmax.f32 %v461, 0.0
    %v498 = vmax.f32 %v463, 0.0
    %v499 = vmax.f32 %v465, 0.0
    %v500 = vmax.f32 %v467, 0.0
    %v501 = vpack.c.bf16 %v471, %v469
    %v502 = vpack.c.bf16 %v472, %v470
    %v503 = vpack.c.bf16 %v475, %v473
    %v504 = vpack.c.bf16 %v476, %v474
    %v505 = vpack.c.bf16 %v479, %v477
    %v506 = vpack.c.bf16 %v480, %v478
    %v507 = vpack.c.bf16 %v483, %v481
    %v508 = vpack.c.bf16 %v484, %v482
    %v509 = vpack.c.bf16 %v487, %v485
    %v510 = vpack.c.bf16 %v488, %v486
    %v511 = vpack.c.bf16 %v491, %v489
    %v512 = vpack.c.bf16 %v492, %v490
    %v513 = vpack.c.bf16 %v495, %v493
    %v514 = vpack.c.bf16 %v496, %v494
    %v515 = vpack.c.bf16 %v499, %v497
    %v516 = vpack.c.bf16 %v500, %v498
    %v517 = vld [vmem:[#allocation3] sm:$0xf]
    %v518 = vld [vmem:[#allocation3 + $0x4] sm:$0xf]
    %v519 = vld [vmem:[#allocation3 + $0x8] sm:$0xf]
    %v520 = vld [vmem:[#allocation3 + $0xc] sm:$0xf]
    %v521 = vld [vmem:[#allocation3 + $0x10] sm:$0xf]
    %v522 = vld [vmem:[#allocation3 + $0x14] sm:$0xf]
    %v523 = vld [vmem:[#allocation3 + $0x18] sm:$0xf]
    %v524 = vld [vmem:[#allocation3 + $0x1c] sm:$0xf]
    %v525 = vld [vmem:[#allocation3 + $0x20] sm:$0xf]
    %v526 = vld [vmem:[#allocation3 + $0x24] sm:$0xf]
    %v527 = vld [vmem:[#allocation3 + $0x28] sm:$0xf]
    %v528 = vld [vmem:[#allocation3 + $0x2c] sm:$0xf]
    %v529 = vld [vmem:[#allocation3 + $0x30] sm:$0xf]
    %v530 = vld [vmem:[#allocation3 + $0x34] sm:$0xf]
    %v531 = vld [vmem:[#allocation3 + $0x38] sm:$0xf]
    %v532 = vld [vmem:[#allocation3 + $0x3c] sm:$0xf]
    %v533 = vld [vmem:[#allocation3 + $0x40] sm:$0xf]
    %v534 = vld [vmem:[#allocation3 + $0x44] sm:$0xf]
    %v535 = vld [vmem:[#allocation3 + $0x48] sm:$0xf]
    %v536 = vld [vmem:[#allocation3 + $0x4c] sm:$0xf]
    %v537 = vld [vmem:[#allocation3 + $0x50] sm:$0xf]
    %v538 = vld [vmem:[#allocation3 + $0x54] sm:$0xf]
    %v539 = vld [vmem:[#allocation3 + $0x58] sm:$0xf]
    %v540 = vld [vmem:[#allocation3 + $0x5c] sm:$0xf]
    %v541 = vld [vmem:[#allocation3 + $0x60] sm:$0xf]
    %v542 = vld [vmem:[#allocation3 + $0x64] sm:$0xf]
    %v543 = vld [vmem:[#allocation3 + $0x68] sm:$0xf]
    %v544 = vld [vmem:[#allocation3 + $0x6c] sm:$0xf]
    %v545 = vld [vmem:[#allocation3 + $0x70] sm:$0xf]
    %v546 = vld [vmem:[#allocation3 + $0x74] sm:$0xf]
    %v547 = vld [vmem:[#allocation3 + $0x78] sm:$0xf]
    %v548 = vld [vmem:[#allocation3 + $0x7c] sm:$0xf]
    %v549 = vld [vmem:[%s6] sm:$0x1]
    %v551 = vlaneseq
    %v552 = vshrl.u32 %v551, 7
    %v553 = vsub.s32 0, %v552
    %v554 = vrot.slane %v549, %v553
    %v588 = vunpack.c.l.b16 %v517
    %v589 = vunpack.c.l.b16 %v518
    %v590 = vunpack.c.l.b16 %v519
    %v591 = vunpack.c.l.b16 %v520
    %v592 = vunpack.c.l.b16 %v521
    %v593 = vunpack.c.l.b16 %v522
    %v594 = vunpack.c.l.b16 %v523
    %v595 = vunpack.c.l.b16 %v524
    %v596 = vunpack.c.l.b16 %v525
    %v597 = vunpack.c.l.b16 %v526
    %v598 = vunpack.c.l.b16 %v527
    %v599 = vunpack.c.l.b16 %v528
    %v600 = vunpack.c.l.b16 %v529
    %v601 = vunpack.c.l.b16 %v530
    %v602 = vunpack.c.l.b16 %v531
    %v603 = vunpack.c.l.b16 %v532
    %v604 = vunpack.c.l.b16 %v533
    %v605 = vunpack.c.l.b16 %v534
    %v606 = vunpack.c.l.b16 %v535
    %v607 = vunpack.c.l.b16 %v536
    %v608 = vunpack.c.l.b16 %v537
    %v609 = vunpack.c.l.b16 %v538
    %v610 = vunpack.c.l.b16 %v539
    %v611 = vunpack.c.l.b16 %v540
    %v612 = vunpack.c.l.b16 %v541
    %v613 = vunpack.c.l.b16 %v542
    %v614 = vunpack.c.l.b16 %v543
    %v615 = vunpack.c.l.b16 %v544
    %v616 = vunpack.c.l.b16 %v545
    %v617 = vunpack.c.l.b16 %v546
    %v618 = vunpack.c.l.b16 %v547
    %v619 = vunpack.c.l.b16 %v548
    %v620 = vpack.c.b16 %v589, %v588
    %v621 = vpack.c.b16 %v591, %v590
    %v622 = vpack.c.b16 %v593, %v592
    %v623 = vpack.c.b16 %v595, %v594
    %v624 = vpack.c.b16 %v597, %v596
    %v625 = vpack.c.b16 %v599, %v598
    %v626 = vpack.c.b16 %v601, %v600
    %v627 = vpack.c.b16 %v603, %v602
    %v628 = vpack.c.b16 %v605, %v604
    %v629 = vpack.c.b16 %v607, %v606
    %v630 = vpack.c.b16 %v609, %v608
    %v631 = vpack.c.b16 %v611, %v610
    %v632 = vpack.c.b16 %v613, %v612
    %v633 = vpack.c.b16 %v615, %v614
    %v634 = vpack.c.b16 %v617, %v616
    %v635 = vpack.c.b16 %v619, %v618
    %652 = vmatprep.subr.bf16.mxu0 0
    %653 = vmatpush1.bf16.msra.mxu0 %v627
    %654 = vmatprep.subr.bf16.mxu0 0
    %655 = vmatpush1.bf16.msra.mxu0 %v626
    %656 = vmatprep.subr.bf16.mxu0 0
    %657 = vmatpush1.bf16.msra.mxu0 %v625
    %658 = vmatprep.subr.bf16.mxu0 0
    %659 = vmatpush1.bf16.msra.mxu0 %v624
    %660 = vmatprep.subr.bf16.mxu0 0
    %661 = vmatpush1.bf16.msra.mxu0 %v623
    %662 = vmatprep.subr.bf16.mxu0 0
    %663 = vmatpush1.bf16.msra.mxu0 %v622
    %664 = vmatprep.subr.bf16.mxu0 0
    %665 = vmatpush1.bf16.msra.mxu0 %v621
    %666 = vmatprep.subr.bf16.mxu0 0
    %667 = vmatpush1.bf16.msra.mxu0 %v620
    %668 = vmatprep.subr.bf16.mxu0 0
    %669 = vmatpush2.bf16.msra.mxu0 %v635
    %670 = vmatprep.subr.bf16.mxu0 0
    %671 = vmatpush2.bf16.msra.mxu0 %v634
    %672 = vmatprep.subr.bf16.mxu0 0
    %673 = vmatpush2.bf16.msra.mxu0 %v633
    %674 = vmatprep.subr.bf16.mxu0 0
    %675 = vmatpush2.bf16.msra.mxu0 %v632
    %676 = vmatprep.subr.bf16.mxu0 0
    %677 = vmatpush2.bf16.msra.mxu0 %v631
    %678 = vmatprep.subr.bf16.mxu0 0
    %679 = vmatpush2.bf16.msra.mxu0 %v630
    %680 = vmatprep.subr.bf16.mxu0 0
    %681 = vmatpush2.bf16.msra.mxu0 %v629
    %682 = vmatprep.subr.bf16.mxu0 0
    %683 = vmatpush2.bf16.msra.mxu0 %v628
    %684 = vmatprep.mubr.bf16.mxu0 %v502
    %685 = vmatmul.mubr.bf16.gmra.mxu0 %v501
    %v686 = vpop.f32.mrf.mxu0
    %v687 = vadd.f32 %v554, %v686
    %v688 = vpop.f32.mrf.mxu0
    %v689 = vpop.f32.mrf.mxu0
    %v690 = vadd.f32 %v554, %v689
    %v691 = vpop.f32.mrf.mxu0
    %692 = vmatprep.mubr.bf16.mxu0 %v504
    %693 = vmatmul.mubr.bf16.gmra.mxu0 %v503
    %v694 = vpop.f32.mrf.mxu0
    %v695 = vadd.f32 %v554, %v694
    %v696 = vpop.f32.mrf.mxu0
    %v697 = vpop.f32.mrf.mxu0
    %v698 = vadd.f32 %v554, %v697
    %v699 = vpop.f32.mrf.mxu0
    %700 = vmatprep.mubr.bf16.mxu0 %v506
    %701 = vmatmul.mubr.bf16.gmra.mxu0 %v505
    %v702 = vpop.f32.mrf.mxu0
    %v703 = vadd.f32 %v554, %v702
    %v704 = vpop.f32.mrf.mxu0
    %v705 = vpop.f32.mrf.mxu0
    %v706 = vadd.f32 %v554, %v705
    %v707 = vpop.f32.mrf.mxu0
    %708 = vmatprep.mubr.bf16.mxu0 %v508
    %709 = vmatmul.mubr.bf16.gmra.mxu0 %v507
    %v710 = vpop.f32.mrf.mxu0
    %v711 = vadd.f32 %v554, %v710
    %v712 = vpop.f32.mrf.mxu0
    %v713 = vpop.f32.mrf.mxu0
    %v714 = vadd.f32 %v554, %v713
    %v715 = vpop.f32.mrf.mxu0
    %716 = vmatprep.mubr.bf16.mxu0 %v510
    %717 = vmatmul.mubr.bf16.gmra.mxu0 %v509
    %v718 = vpop.f32.mrf.mxu0
    %v719 = vadd.f32 %v554, %v718
    %v720 = vpop.f32.mrf.mxu0
    %v721 = vpop.f32.mrf.mxu0
    %v722 = vadd.f32 %v554, %v721
    %v723 = vpop.f32.mrf.mxu0
    %724 = vmatprep.mubr.bf16.mxu0 %v512
    %725 = vmatmul.mubr.bf16.gmra.mxu0 %v511
    %v726 = vpop.f32.mrf.mxu0
    %v727 = vadd.f32 %v554, %v726
    %v728 = vpop.f32.mrf.mxu0
    %v729 = vpop.f32.mrf.mxu0
    %v730 = vadd.f32 %v554, %v729
    %v731 = vpop.f32.mrf.mxu0
    %732 = vmatprep.mubr.bf16.mxu0 %v514
    %733 = vmatmul.mubr.bf16.gmra.mxu0 %v513
    %v734 = vpop.f32.mrf.mxu0
    %v735 = vadd.f32 %v554, %v734
    %v736 = vpop.f32.mrf.mxu0
    %v737 = vpop.f32.mrf.mxu0
    %v738 = vadd.f32 %v554, %v737
    %v739 = vpop.f32.mrf.mxu0
    %740 = vmatprep.mubr.bf16.mxu0 %v516
    %741 = vmatmul.mubr.bf16.gmra.mxu0 %v515
    %v742 = vpop.f32.mrf.mxu0
    %v743 = vadd.f32 %v554, %v742
    %v744 = vpop.f32.mrf.mxu0
    %v745 = vpop.f32.mrf.mxu0
    %v746 = vadd.f32 %v554, %v745
    %v747 = vpop.f32.mrf.mxu0
    %748 = vdwg.mxu0
    %v749 = vmax.f32 %v687, 0.0
    %v750 = vmax.f32 %v690, 0.0
    %v751 = vmax.f32 %v695, 0.0
    %v752 = vmax.f32 %v698, 0.0
    %v753 = vmax.f32 %v703, 0.0
    %v754 = vmax.f32 %v706, 0.0
    %v755 = vmax.f32 %v711, 0.0
    %v756 = vmax.f32 %v714, 0.0
    %v757 = vmax.f32 %v719, 0.0
    %v758 = vmax.f32 %v722, 0.0
    %v759 = vmax.f32 %v727, 0.0
    %v760 = vmax.f32 %v730, 0.0
    %v761 = vmax.f32 %v735, 0.0
    %v762 = vmax.f32 %v738, 0.0
    %v763 = vmax.f32 %v743, 0.0
    %v764 = vmax.f32 %v746, 0.0
    %v765 = vpack.c.bf16 %v750, %v749
    %v766 = vpack.c.bf16 %v752, %v751
    %v767 = vpack.c.bf16 %v754, %v753
    %v768 = vpack.c.bf16 %v756, %v755
    %v769 = vpack.c.bf16 %v758, %v757
    %v770 = vpack.c.bf16 %v760, %v759
    %v771 = vpack.c.bf16 %v762, %v761
    %v772 = vpack.c.bf16 %v764, %v763
    %v773 = vld [vmem:[%s7] sm:$0xf]
    %v774 = vld [vmem:[%s7 + $0x4] sm:$0xf]
    %v775 = vld [vmem:[%s7 + $0x8] sm:$0xf]
    %v776 = vld [vmem:[%s7 + $0xc] sm:$0xf]
    %v777 = vld [vmem:[%s7 + $0x10] sm:$0xf]
    %v778 = vld [vmem:[%s7 + $0x14] sm:$0xf]
    %v779 = vld [vmem:[%s7 + $0x18] sm:$0xf]
    %v780 = vld [vmem:[%s7 + $0x1c] sm:$0xf]
    %v781 = vld [vmem:[%s7 + $0x20] sm:$0xf]
    %v782 = vld [vmem:[%s7 + $0x24] sm:$0xf]
    %v783 = vld [vmem:[%s7 + $0x28] sm:$0xf]
    %v784 = vld [vmem:[%s7 + $0x2c] sm:$0xf]
    %v785 = vld [vmem:[%s7 + $0x30] sm:$0xf]
    %v786 = vld [vmem:[%s7 + $0x34] sm:$0xf]
    %v787 = vld [vmem:[%s7 + $0x38] sm:$0xf]
    %v788 = vld [vmem:[%s7 + $0x3c] sm:$0xf]
    %v789 = vld [vmem:[%s8] sm:$0x1]
    %v791 = vlaneseq
    %v792 = vshrl.u32 %v791, 7
    %v793 = vsub.s32 0, %v792
    %v794 = vrot.slane %v789, %v793
    %v812 = vunpack.c.l.b16 %v773
    %v813 = vunpack.c.l.b16 %v774
    %v814 = vunpack.c.l.b16 %v775
    %v815 = vunpack.c.l.b16 %v776
    %v816 = vunpack.c.l.b16 %v777
    %v817 = vunpack.c.l.b16 %v778
    %v818 = vunpack.c.l.b16 %v779
    %v819 = vunpack.c.l.b16 %v780
    %v820 = vunpack.c.l.b16 %v781
    %v821 = vunpack.c.l.b16 %v782
    %v822 = vunpack.c.l.b16 %v783
    %v823 = vunpack.c.l.b16 %v784
    %v824 = vunpack.c.l.b16 %v785
    %v825 = vunpack.c.l.b16 %v786
    %v826 = vunpack.c.l.b16 %v787
    %v827 = vunpack.c.l.b16 %v788
    %v828 = vpack.c.b16 %v813, %v812
    %v829 = vpack.c.b16 %v815, %v814
    %v830 = vpack.c.b16 %v817, %v816
    %v831 = vpack.c.b16 %v819, %v818
    %v832 = vpack.c.b16 %v821, %v820
    %v833 = vpack.c.b16 %v823, %v822
    %v834 = vpack.c.b16 %v825, %v824
    %v835 = vpack.c.b16 %v827, %v826
    %844 = vmatprep.subr.bf16.mxu0 0
    %845 = vmatpush1.bf16.msra.mxu0 %v835
    %846 = vmatprep.subr.bf16.mxu0 0
    %847 = vmatpush1.bf16.msra.mxu0 %v834
    %848 = vmatprep.subr.bf16.mxu0 0
    %849 = vmatpush1.bf16.msra.mxu0 %v833
    %850 = vmatprep.subr.bf16.mxu0 0
    %851 = vmatpush1.bf16.msra.mxu0 %v832
    %852 = vmatprep.subr.bf16.mxu0 0
    %853 = vmatpush1.bf16.msra.mxu0 %v831
    %854 = vmatprep.subr.bf16.mxu0 0
    %855 = vmatpush1.bf16.msra.mxu0 %v830
    %856 = vmatprep.subr.bf16.mxu0 0
    %857 = vmatpush1.bf16.msra.mxu0 %v829
    %858 = vmatprep.subr.bf16.mxu0 0
    %859 = vmatpush1.bf16.msra.mxu0 %v828
    %860 = vmatprep.subr.bf16.mxu0 0
    %861 = vmatpush2.bf16.msra.mxu0 0
    %862 = vmatprep.subr.bf16.mxu0 0
    %863 = vmatpush2.bf16.msra.mxu0 0
    %864 = vmatprep.subr.bf16.mxu0 0
    %865 = vmatpush2.bf16.msra.mxu0 0
    %866 = vmatprep.subr.bf16.mxu0 0
    %867 = vmatpush2.bf16.msra.mxu0 0
    %868 = vmatprep.subr.bf16.mxu0 0
    %869 = vmatpush2.bf16.msra.mxu0 0
    %870 = vmatprep.subr.bf16.mxu0 0
    %871 = vmatpush2.bf16.msra.mxu0 0
    %872 = vmatprep.subr.bf16.mxu0 0
    %873 = vmatpush2.bf16.msra.mxu0 0
    %874 = vmatprep.subr.bf16.mxu0 0
    %875 = vmatpush2.bf16.msra.mxu0 0
    %876 = vmatprep.mubr.bf16.mxu0 0
    %877 = vmatmul.mubr.bf16.gmra.mxu0 %v765
    %v878 = vpop.f32.mrf.mxu0
    %v879 = vadd.f32 %v794, %v878
    %v880 = vpop.f32.mrf.mxu0
    %v881 = vpop.f32.mrf.mxu0
    %v882 = vadd.f32 %v794, %v881
    %v883 = vpop.f32.mrf.mxu0
    %884 = vmatprep.mubr.bf16.mxu0 0
    %885 = vmatmul.mubr.bf16.gmra.mxu0 %v766
    %v886 = vpop.f32.mrf.mxu0
    %v887 = vadd.f32 %v794, %v886
    %v888 = vpop.f32.mrf.mxu0
    %v889 = vpop.f32.mrf.mxu0
    %v890 = vadd.f32 %v794, %v889
    %v891 = vpop.f32.mrf.mxu0
    %892 = vmatprep.mubr.bf16.mxu0 0
    %893 = vmatmul.mubr.bf16.gmra.mxu0 %v767
    %v894 = vpop.f32.mrf.mxu0
    %v895 = vadd.f32 %v794, %v894
    %v896 = vpop.f32.mrf.mxu0
    %v897 = vpop.f32.mrf.mxu0
    %v898 = vadd.f32 %v794, %v897
    %v899 = vpop.f32.mrf.mxu0
    %900 = vmatprep.mubr.bf16.mxu0 0
    %901 = vmatmul.mubr.bf16.gmra.mxu0 %v768
    %v902 = vpop.f32.mrf.mxu0
    %v903 = vadd.f32 %v794, %v902
    %v904 = vpop.f32.mrf.mxu0
    %v905 = vpop.f32.mrf.mxu0
    %v906 = vadd.f32 %v794, %v905
    %v907 = vpop.f32.mrf.mxu0
    %908 = vmatprep.mubr.bf16.mxu0 0
    %909 = vmatmul.mubr.bf16.gmra.mxu0 %v769
    %v910 = vpop.f32.mrf.mxu0
    %v911 = vadd.f32 %v794, %v910
    %v912 = vpop.f32.mrf.mxu0
    %v913 = vpop.f32.mrf.mxu0
    %v914 = vadd.f32 %v794, %v913
    %v915 = vpop.f32.mrf.mxu0
    %916 = vmatprep.mubr.bf16.mxu0 0
    %917 = vmatmul.mubr.bf16.gmra.mxu0 %v770
    %v918 = vpop.f32.mrf.mxu0
    %v919 = vadd.f32 %v794, %v918
    %v920 = vpop.f32.mrf.mxu0
    %v921 = vpop.f32.mrf.mxu0
    %v922 = vadd.f32 %v794, %v921
    %v923 = vpop.f32.mrf.mxu0
    %924 = vmatprep.mubr.bf16.mxu0 0
    %925 = vmatmul.mubr.bf16.gmra.mxu0 %v771
    %v926 = vpop.f32.mrf.mxu0
    %v927 = vadd.f32 %v794, %v926
    %v928 = vpop.f32.mrf.mxu0
    %v929 = vpop.f32.mrf.mxu0
    %v930 = vadd.f32 %v794, %v929
    %v931 = vpop.f32.mrf.mxu0
    %932 = vmatprep.mubr.bf16.mxu0 0
    %933 = vmatmul.mubr.bf16.gmra.mxu0 %v772
    %v934 = vpop.f32.mrf.mxu0
    %v935 = vadd.f32 %v794, %v934
    %v936 = vpop.f32.mrf.mxu0
    %v937 = vpop.f32.mrf.mxu0
    %v938 = vadd.f32 %v794, %v937
    %v939 = vpop.f32.mrf.mxu0
    %940 = vdwg.mxu0
    %v941 = vmax.f32 %v879, 0.0
    %v942 = vmax.f32 %v882, 0.0
    %v943 = vmax.f32 %v887, 0.0
    %v944 = vmax.f32 %v890, 0.0
    %v945 = vmax.f32 %v895, 0.0
    %v946 = vmax.f32 %v898, 0.0
    %v947 = vmax.f32 %v903, 0.0
    %v948 = vmax.f32 %v906, 0.0
    %v949 = vmax.f32 %v911, 0.0
    %v950 = vmax.f32 %v914, 0.0
    %v951 = vmax.f32 %v919, 0.0
    %v952 = vmax.f32 %v922, 0.0
    %v953 = vmax.f32 %v927, 0.0
    %v954 = vmax.f32 %v930, 0.0
    %v955 = vmax.f32 %v935, 0.0
    %v956 = vmax.f32 %v938, 0.0
    %v957 = vpack.c.bf16 %v942, %v941
    %v958 = vpack.c.bf16 %v944, %v943
    %v959 = vpack.c.bf16 %v946, %v945
    %v960 = vpack.c.bf16 %v948, %v947
    %v961 = vpack.c.bf16 %v950, %v949
    %v962 = vpack.c.bf16 %v952, %v951
    %v963 = vpack.c.bf16 %v954, %v953
    %v964 = vpack.c.bf16 %v956, %v955
    %v965 = vld [vmem:[%s9] sm:$0xf]
    %v966 = vld [vmem:[%s9 + $0x4] sm:$0xf]
    %v967 = vld [vmem:[%s9 + $0x8] sm:$0xf]
    %v968 = vld [vmem:[%s9 + $0xc] sm:$0xf]
    %v969 = vld [vmem:[%s9 + $0x10] sm:$0xf]
    %v970 = vld [vmem:[%s9 + $0x14] sm:$0xf]
    %v971 = vld [vmem:[%s9 + $0x18] sm:$0xf]
    %v972 = vld [vmem:[%s9 + $0x1c] sm:$0xf]
    %v973 = vld [vmem:[%s9 + $0x20] sm:$0xf]
    %v974 = vld [vmem:[%s9 + $0x24] sm:$0xf]
    %v975 = vld [vmem:[%s9 + $0x28] sm:$0xf]
    %v976 = vld [vmem:[%s9 + $0x2c] sm:$0xf]
    %v977 = vld [vmem:[%s9 + $0x30] sm:$0xf]
    %v978 = vld [vmem:[%s9 + $0x34] sm:$0xf]
    %v979 = vld [vmem:[%s9 + $0x38] sm:$0xf]
    %v980 = vld [vmem:[%s9 + $0x3c] sm:$0xf]
    %v981 = vld [vmem:[#allocation2] sm:$0x1]
    %v983 = vlaneseq
    %v984 = vshrl.u32 %v983, 7
    %v985 = vsub.s32 0, %v984
    %v986 = vrot.slane %v981, %v985
    %v1004 = vunpack.c.l.b16 %v965
    %v1005 = vunpack.c.l.b16 %v966
    %v1006 = vunpack.c.l.b16 %v967
    %v1007 = vunpack.c.l.b16 %v968
    %v1008 = vunpack.c.l.b16 %v969
    %v1009 = vunpack.c.l.b16 %v970
    %v1010 = vunpack.c.l.b16 %v971
    %v1011 = vunpack.c.l.b16 %v972
    %v1012 = vunpack.c.l.b16 %v973
    %v1013 = vunpack.c.l.b16 %v974
    %v1014 = vunpack.c.l.b16 %v975
    %v1015 = vunpack.c.l.b16 %v976
    %v1016 = vunpack.c.l.b16 %v977
    %v1017 = vunpack.c.l.b16 %v978
    %v1018 = vunpack.c.l.b16 %v979
    %v1019 = vunpack.c.l.b16 %v980
    %v1020 = vpack.c.b16 %v1005, %v1004
    %v1021 = vpack.c.b16 %v1007, %v1006
    %v1022 = vpack.c.b16 %v1009, %v1008
    %v1023 = vpack.c.b16 %v1011, %v1010
    %v1024 = vpack.c.b16 %v1013, %v1012
    %v1025 = vpack.c.b16 %v1015, %v1014
    %v1026 = vpack.c.b16 %v1017, %v1016
    %v1027 = vpack.c.b16 %v1019, %v1018
    %1036 = vmatprep.subr.bf16.mxu0 0
    %1037 = vmatpush1.bf16.msra.mxu0 %v1027
    %1038 = vmatprep.subr.bf16.mxu0 0
    %1039 = vmatpush1.bf16.msra.mxu0 %v1026
    %1040 = vmatprep.subr.bf16.mxu0 0
    %1041 = vmatpush1.bf16.msra.mxu0 %v1025
    %1042 = vmatprep.subr.bf16.mxu0 0
    %1043 = vmatpush1.bf16.msra.mxu0 %v1024
    %1044 = vmatprep.subr.bf16.mxu0 0
    %1045 = vmatpush1.bf16.msra.mxu0 %v1023
    %1046 = vmatprep.subr.bf16.mxu0 0
    %1047 = vmatpush1.bf16.msra.mxu0 %v1022
    %1048 = vmatprep.subr.bf16.mxu0 0
    %1049 = vmatpush1.bf16.msra.mxu0 %v1021
    %1050 = vmatprep.subr.bf16.mxu0 0
    %1051 = vmatpush1.bf16.msra.mxu0 %v1020
    %1052 = vmatprep.subr.bf16.mxu0 0
    %1053 = vmatpush2.bf16.msra.mxu0 0
    %1054 = vmatprep.subr.bf16.mxu0 0
    %1055 = vmatpush2.bf16.msra.mxu0 0
    %1056 = vmatprep.subr.bf16.mxu0 0
    %1057 = vmatpush2.bf16.msra.mxu0 0
    %1058 = vmatprep.subr.bf16.mxu0 0
    %1059 = vmatpush2.bf16.msra.mxu0 0
    %1060 = vmatprep.subr.bf16.mxu0 0
    %1061 = vmatpush2.bf16.msra.mxu0 0
    %1062 = vmatprep.subr.bf16.mxu0 0
    %1063 = vmatpush2.bf16.msra.mxu0 0
    %1064 = vmatprep.subr.bf16.mxu0 0
    %1065 = vmatpush2.bf16.msra.mxu0 0
    %1066 = vmatprep.subr.bf16.mxu0 0
    %1067 = vmatpush2.bf16.msra.mxu0 0
    %1068 = vmatprep.mubr.bf16.mxu0 0
    %1069 = vmatmul.mubr.bf16.gmra.mxu0 %v957
    %v1070 = vpop.f32.mrf.mxu0
    %v1071 = vadd.f32 %v986, %v1070
    %v1072 = vpop.f32.mrf.mxu0
    %v1073 = vpop.f32.mrf.mxu0
    %v1074 = vadd.f32 %v986, %v1073
    %v1075 = vpop.f32.mrf.mxu0
    %1076 = vmatprep.mubr.bf16.mxu0 0
    %1077 = vmatmul.mubr.bf16.gmra.mxu0 %v958
    %v1078 = vpop.f32.mrf.mxu0
    %v1079 = vadd.f32 %v986, %v1078
    %v1080 = vpop.f32.mrf.mxu0
    %v1081 = vpop.f32.mrf.mxu0
    %v1082 = vadd.f32 %v986, %v1081
    %v1083 = vpop.f32.mrf.mxu0
    %1084 = vmatprep.mubr.bf16.mxu0 0
    %1085 = vmatmul.mubr.bf16.gmra.mxu0 %v959
    %v1086 = vpop.f32.mrf.mxu0
    %v1087 = vadd.f32 %v986, %v1086
    %v1088 = vpop.f32.mrf.mxu0
    %v1089 = vpop.f32.mrf.mxu0
    %v1090 = vadd.f32 %v986, %v1089
    %v1091 = vpop.f32.mrf.mxu0
    %1092 = vmatprep.mubr.bf16.mxu0 0
    %1093 = vmatmul.mubr.bf16.gmra.mxu0 %v960
    %v1094 = vpop.f32.mrf.mxu0
    %v1095 = vadd.f32 %v986, %v1094
    %v1096 = vpop.f32.mrf.mxu0
    %v1097 = vpop.f32.mrf.mxu0
    %v1098 = vadd.f32 %v986, %v1097
    %v1099 = vpop.f32.mrf.mxu0
    %1100 = vmatprep.mubr.bf16.mxu0 0
    %1101 = vmatmul.mubr.bf16.gmra.mxu0 %v961
    %v1102 = vpop.f32.mrf.mxu0
    %v1103 = vadd.f32 %v986, %v1102
    %v1104 = vpop.f32.mrf.mxu0
    %v1105 = vpop.f32.mrf.mxu0
    %v1106 = vadd.f32 %v986, %v1105
    %v1107 = vpop.f32.mrf.mxu0
    %1108 = vmatprep.mubr.bf16.mxu0 0
    %1109 = vmatmul.mubr.bf16.gmra.mxu0 %v962
    %v1110 = vpop.f32.mrf.mxu0
    %v1111 = vadd.f32 %v986, %v1110
    %v1112 = vpop.f32.mrf.mxu0
    %v1113 = vpop.f32.mrf.mxu0
    %v1114 = vadd.f32 %v986, %v1113
    %v1115 = vpop.f32.mrf.mxu0
    %1116 = vmatprep.mubr.bf16.mxu0 0
    %1117 = vmatmul.mubr.bf16.gmra.mxu0 %v963
    %v1118 = vpop.f32.mrf.mxu0
    %v1119 = vadd.f32 %v986, %v1118
    %v1120 = vpop.f32.mrf.mxu0
    %v1121 = vpop.f32.mrf.mxu0
    %v1122 = vadd.f32 %v986, %v1121
    %v1123 = vpop.f32.mrf.mxu0
    %1124 = vmatprep.mubr.bf16.mxu0 0
    %1125 = vmatmul.mubr.bf16.gmra.mxu0 %v964
    %v1126 = vpop.f32.mrf.mxu0
    %v1127 = vadd.f32 %v986, %v1126
    %v1128 = vpop.f32.mrf.mxu0
    %v1129 = vpop.f32.mrf.mxu0
    %v1130 = vadd.f32 %v986, %v1129
    %v1131 = vpop.f32.mrf.mxu0
    %1132 = vdwg.mxu0
    %v1133 = vxor.u32 %v1071, 2147483648
    %v1134 = vxor.u32 %v1074, 2147483648
    %v1135 = vxor.u32 %v1079, 2147483648
    %v1136 = vxor.u32 %v1082, 2147483648
    %v1137 = vxor.u32 %v1087, 2147483648
    %v1138 = vxor.u32 %v1090, 2147483648
    %v1139 = vxor.u32 %v1095, 2147483648
    %v1140 = vxor.u32 %v1098, 2147483648
    %v1141 = vxor.u32 %v1103, 2147483648
    %v1142 = vxor.u32 %v1106, 2147483648
    %v1143 = vxor.u32 %v1111, 2147483648
    %v1144 = vxor.u32 %v1114, 2147483648
    %v1145 = vxor.u32 %v1119, 2147483648
    %v1146 = vxor.u32 %v1122, 2147483648
    %v1147 = vxor.u32 %v1127, 2147483648
    %v1148 = vxor.u32 %v1130, 2147483648
    %v1149 = vmul.f32 %v1133, 1.442695
    %v1150 = vpow.pop %v1149
    %v1151 = vmul.f32 %v1134, 1.442695
    %v1152 = vpow.pop %v1151
    %v1153 = vmul.f32 %v1135, 1.442695
    %v1154 = vpow.pop %v1153
    %v1155 = vmul.f32 %v1136, 1.442695
    %v1156 = vpow.pop %v1155
    %v1157 = vmul.f32 %v1137, 1.442695
    %v1158 = vpow.pop %v1157
    %v1159 = vmul.f32 %v1138, 1.442695
    %v1160 = vpow.pop %v1159
    %v1161 = vmul.f32 %v1139, 1.442695
    %v1162 = vpow.pop %v1161
    %v1163 = vmul.f32 %v1140, 1.442695
    %v1164 = vpow.pop %v1163
    %v1165 = vmul.f32 %v1141, 1.442695
    %v1166 = vpow.pop %v1165
    %v1167 = vmul.f32 %v1142, 1.442695
    %v1168 = vpow.pop %v1167
    %v1169 = vmul.f32 %v1143, 1.442695
    %v1170 = vpow.pop %v1169
    %v1171 = vmul.f32 %v1144, 1.442695
    %v1172 = vpow.pop %v1171
    %v1173 = vmul.f32 %v1145, 1.442695
    %v1174 = vpow.pop %v1173
    %v1175 = vmul.f32 %v1146, 1.442695
    %v1176 = vpow.pop %v1175
    %v1177 = vmul.f32 %v1147, 1.442695
    %v1178 = vpow.pop %v1177
    %v1179 = vmul.f32 %v1148, 1.442695
    %v1180 = vpow.pop %v1179
    %v1181 = vadd.f32 %v1150, 1.0
    %v1182 = vadd.f32 %v1152, 1.0
    %v1183 = vadd.f32 %v1154, 1.0
    %v1184 = vadd.f32 %v1156, 1.0
    %v1185 = vadd.f32 %v1158, 1.0
    %v1186 = vadd.f32 %v1160, 1.0
    %v1187 = vadd.f32 %v1162, 1.0
    %v1188 = vadd.f32 %v1164, 1.0
    %v1189 = vadd.f32 %v1166, 1.0
    %v1190 = vadd.f32 %v1168, 1.0
    %v1191 = vadd.f32 %v1170, 1.0
    %v1192 = vadd.f32 %v1172, 1.0
    %v1193 = vadd.f32 %v1174, 1.0
    %v1194 = vadd.f32 %v1176, 1.0
    %v1195 = vadd.f32 %v1178, 1.0
    %v1196 = vadd.f32 %v1180, 1.0
    %v1197 = vrcp.pop %v1181
    %v1198 = vmul.f32 1.0, %v1197
    %v1199 = vrcp.pop %v1182
    %v1200 = vmul.f32 1.0, %v1199
    %v1201 = vrcp.pop %v1183
    %v1202 = vmul.f32 1.0, %v1201
    %v1203 = vrcp.pop %v1184
    %v1204 = vmul.f32 1.0, %v1203
    %v1205 = vrcp.pop %v1185
    %v1206 = vmul.f32 1.0, %v1205
    %v1207 = vrcp.pop %v1186
    %v1208 = vmul.f32 1.0, %v1207
    %v1209 = vrcp.pop %v1187
    %v1210 = vmul.f32 1.0, %v1209
    %v1211 = vrcp.pop %v1188
    %v1212 = vmul.f32 1.0, %v1211
    %v1213 = vrcp.pop %v1189
    %v1214 = vmul.f32 1.0, %v1213
    %v1215 = vrcp.pop %v1190
    %v1216 = vmul.f32 1.0, %v1215
    %v1217 = vrcp.pop %v1191
    %v1218 = vmul.f32 1.0, %v1217
    %v1219 = vrcp.pop %v1192
    %v1220 = vmul.f32 1.0, %v1219
    %v1221 = vrcp.pop %v1193
    %v1222 = vmul.f32 1.0, %v1221
    %v1223 = vrcp.pop %v1194
    %v1224 = vmul.f32 1.0, %v1223
    %v1225 = vrcp.pop %v1195
    %v1226 = vmul.f32 1.0, %v1225
    %v1227 = vrcp.pop %v1196
    %v1228 = vmul.f32 1.0, %v1227
    %vm1229 = vcmask 7168
    %1230 = vst.msk [vmem:[%s11] sm:$0xff] %vm1229, %v1198
    %1231 = vst.msk [vmem:[%s11 + $0x8] sm:$0xff] %vm1229, %v1200
    %1232 = vst.msk [vmem:[%s11 + $0x10] sm:$0xff] %vm1229, %v1202
    %1233 = vst.msk [vmem:[%s11 + $0x18] sm:$0xff] %vm1229, %v1204
    %1234 = vst.msk [vmem:[%s11 + $0x20] sm:$0xff] %vm1229, %v1206
    %1235 = vst.msk [vmem:[%s11 + $0x28] sm:$0xff] %vm1229, %v1208
    %1236 = vst.msk [vmem:[%s11 + $0x30] sm:$0xff] %vm1229, %v1210
    %1237 = vst.msk [vmem:[%s11 + $0x38] sm:$0xff] %vm1229, %v1212
    %1238 = vst.msk [vmem:[%s11 + $0x40] sm:$0xff] %vm1229, %v1214
    %1239 = vst.msk [vmem:[%s11 + $0x48] sm:$0xff] %vm1229, %v1216
    %1240 = vst.msk [vmem:[%s11 + $0x50] sm:$0xff] %vm1229, %v1218
    %1241 = vst.msk [vmem:[%s11 + $0x58] sm:$0xff] %vm1229, %v1220
    %1242 = vst.msk [vmem:[%s11 + $0x60] sm:$0xff] %vm1229, %v1222
    %1243 = vst.msk [vmem:[%s11 + $0x68] sm:$0xff] %vm1229, %v1224
    %1244 = vst.msk [vmem:[%s11 + $0x70] sm:$0xff] %vm1229, %v1226
    %1245 = vst.msk [vmem:[%s11 + $0x78] sm:$0xff] %vm1229, %v1228
    // Predicated region
    $region50: #{tpu_custom_call.1} parent=1 // pred_check
      _
    $region51: #{tpu_custom_call.1} parent=1 // pred_check_branch
      %1247 = sbr.rel (0) target = $region53
    $region52: #{tpu_custom_call.1} parent=1 // pred_region
      _
    $region53: #{tpu_custom_call.1} parent=1 // pred_fallthru
      _
    // Predicated region
    $region54: #{tpu_custom_call.1} parent=1 // pred_check
      _
    $region55: #{tpu_custom_call.1} parent=1 // pred_check_branch
      %1249 = sbr.rel (0) target = $region57
    $region56: #{tpu_custom_call.1} parent=1 // pred_region
      _
    $region57: #{tpu_custom_call.1} parent=1 // pred_fallthru
      _
    %1250 = vsyncpa [#allocation4], 1

</llo_original>
